<compile_context>
chip_gen: v5e
topology: v5e:2x2
jax: 0.10.0
libtpu: 0.0.40
codegen_flags: <defaults>
</compile_context>

<pallas_src>
import jax
import jax.numpy as jnp
from jax.experimental import pallas as pl
from jax.experimental.pallas import tpu as pltpu


def gesture_classifier_kernel(x_ref, w1_ref, b1_ref, w2_ref, b2_ref, out_ref):
    # fc1 + relu : x [tb, d_in] bf16, w1 [d_in, hidden] bf16, b1 [1, hidden] f32
    h = jnp.dot(x_ref[...], w1_ref[...], preferred_element_type=jnp.float32)
    h = jnp.maximum(h + b1_ref[...], 0.0)

    # fc2 : w2 [hidden, classes] bf16, b2 [1, classes] f32
    logits = jnp.dot(h.astype(w2_ref.dtype), w2_ref[...],
                     preferred_element_type=jnp.float32)
    logits = logits + b2_ref[...]

    # Numerically stable softmax over classes (dim=1), exact normalization.
    m = jnp.max(logits, axis=1, keepdims=True)
    e = jnp.exp(logits - m)
    denom = jnp.sum(e, axis=1, keepdims=True)
    out_ref[...] = (e / denom).astype(out_ref.dtype)


def prepare_params(w1, b1, w2, b2):
    """One-time parameter prep: bf16 matmul weights, f32 row-vector biases."""
    return (w1.astype(jnp.bfloat16),
            b1.reshape(1, -1).astype(jnp.float32),
            w2.astype(jnp.bfloat16),
            b2.reshape(1, -1).astype(jnp.float32))


def gesture_classifier_forward(x, params, num_landmarks, *, block_b=2048):
    """Forward pass of GestureClassifier.

    x      : (..., num_landmarks, 2) or (B, num_landmarks*2), any float dtype
    params : output of prepare_params(w1, b1, w2, b2)
    Returns (B, num_classes) softmax probabilities (f32).
    """
    w1_p, b1_p, w2_p, b2_p = params
    d_in = num_landmarks * 2
    hidden = w1_p.shape[1]
    num_classes = w2_p.shape[1]

    x_bf = x.reshape(-1, d_in).astype(jnp.bfloat16)
    batch = x_bf.shape[0]

    # Batch tile: multiple of 8 sublanes; aim for >=2 grid steps so the
    # "parallel" batch axis can shard across both TensorCores on v7x.
    align8 = lambda n: -(-n // 8) * 8
    tb = min(block_b, max(8, align8(pl.cdiv(batch, 2))))
    b_pad = -(-batch // tb) * tb
    if b_pad != batch:
        x_bf = jnp.pad(x_bf, ((0, b_pad - batch), (0, 0)))

    cost = pl.CostEstimate(
        flops=2 * b_pad * (d_in * hidden + hidden * num_classes),
        transcendentals=b_pad * num_classes,
        bytes_accessed=(b_pad * d_in * 2                      # x (bf16) read
                        + b_pad * num_classes * 4             # probs write
                        + (d_in * hidden + hidden * num_classes) * 2
                        + (hidden + num_classes) * 4),
    )

    out = pl.pallas_call(
        gesture_classifier_kernel,
        out_shape=jax.ShapeDtypeStruct((b_pad, num_classes), jnp.float32),
        grid=(b_pad // tb,),
        in_specs=[
            pl.BlockSpec((tb, d_in), lambda i: (i, 0)),           # x: streamed
            pl.BlockSpec((d_in, hidden), lambda i: (0, 0)),        # w1: resident
            pl.BlockSpec((1, hidden), lambda i: (0, 0)),           # b1: resident
            pl.BlockSpec((hidden, num_classes), lambda i: (0, 0)), # w2: resident
            pl.BlockSpec((1, num_classes), lambda i: (0, 0)),      # b2: resident
        ],
        out_specs=pl.BlockSpec((tb, num_classes), lambda i: (i, 0)),
        compiler_params=pltpu.CompilerParams(
            dimension_semantics=("parallel",)),
        cost_estimate=cost,
    )(x_bf, w1_p, b1_p, w2_p, b2_p)

    return out[:batch] if b_pad != batch else out


if __name__ == "__main__":
    # Module-consistent small shapes: 21 hand landmarks (x, y), 5 gestures.
    num_landmarks = 21
    num_classes = 5
    batch = 8

    key = jax.random.PRNGKey(0)
    kx, kw1, kb1, kw2, kb2 = jax.random.split(key, 5)

    d_in = num_landmarks * 2
    # Deterministic synthetic parameters, stored as (in, out) = torch W.T.
    w1 = jax.random.normal(kw1, (d_in, 64), jnp.float32) * 0.1
    b1 = jax.random.normal(kb1, (64,), jnp.float32) * 0.1
    w2 = jax.random.normal(kw2, (64, num_classes), jnp.float32) * 0.1
    b2 = jax.random.normal(kb2, (num_classes,), jnp.float32) * 0.1

    # Input like the torch module sees: (B, num_landmarks, 2) -> view(-1, L*2)
    x = jax.random.normal(kx, (batch, num_landmarks, 2), jnp.float32)

    params = prepare_params(w1, b1, w2, b2)   # hoisted one-time prep
    out = gesture_classifier_forward(x, params, num_landmarks)
    out = jax.block_until_ready(out)

    # Pure-JAX f32 reference for correctness.
    x2d = x.reshape(-1, d_in)
    ref_h = jnp.maximum(x2d @ w1 + b1.reshape(1, -1), 0.0)
    ref_logits = ref_h @ w2 + b2.reshape(1, -1)
    ref = jax.nn.softmax(ref_logits, axis=1)

    assert out.shape == (batch, num_classes)
    # Exact divide in-kernel -> rows sum to 1 within f32 rounding.
    assert bool(jnp.allclose(jnp.sum(out, axis=1), 1.0, atol=1e-4))
    # bf16 matmul operands vs f32 reference -> loose-ish tolerance.
    assert bool(jnp.allclose(out, ref, atol=1e-2, rtol=1e-2))

    print("KERNEL_OK")
</pallas_src>

<mosaic_0001>
module attributes {stable_mosaic.version = 11 : i64} {
  func.func @gesture_classifier_kernel(%arg0: i32, %arg1: memref<8x42xbf16, #tpu.memory_space<vmem>>, %arg2: memref<42x64xbf16, #tpu.memory_space<vmem>>, %arg3: memref<1x64xf32, #tpu.memory_space<vmem>>, %arg4: memref<64x5xbf16, #tpu.memory_space<vmem>>, %arg5: memref<1x5xf32, #tpu.memory_space<vmem>>, %arg6: memref<8x5xf32, #tpu.memory_space<vmem>>) attributes {dimension_semantics = [#tpu.dimension_semantics<parallel>], iteration_bounds = array<i64: 1>, scalar_prefetch = 0 : i64, scratch_operands = 0 : i64, tpu.core_type = #tpu.core_type<tc>, window_params = [{transform_indices = @transform_0, window_bounds = array<i64: 8, 42>}, {pipeline_mode = #tpu.pipeline_mode<synchronous>, transform_indices = @transform_1, window_bounds = array<i64: 42, 64>}, {pipeline_mode = #tpu.pipeline_mode<synchronous>, transform_indices = @transform_2, window_bounds = array<i64: 1, 64>}, {pipeline_mode = #tpu.pipeline_mode<synchronous>, transform_indices = @transform_3, window_bounds = array<i64: 64, 5>}, {pipeline_mode = #tpu.pipeline_mode<synchronous>, transform_indices = @transform_4, window_bounds = array<i64: 1, 5>}, {transform_indices = @transform_5, window_bounds = array<i64: 8, 5>}]} {
    %c0 = arith.constant 0 : index
    %c0_0 = arith.constant 0 : index
    %0 = vector.load %arg1[%c0, %c0_0] : memref<8x42xbf16, #tpu.memory_space<vmem>>, vector<8x42xbf16>
    %c0_1 = arith.constant 0 : index
    %c0_2 = arith.constant 0 : index
    %1 = vector.load %arg2[%c0_1, %c0_2] : memref<42x64xbf16, #tpu.memory_space<vmem>>, vector<42x64xbf16>
    %cst = arith.constant dense<0.000000e+00> : vector<8x64xf32>
    %2 = tpu.matmul %0, %1, %cst {dimension_numbers = #tpu.dot_dimension_numbers<[1], [0], [0], [1], [0, 0, 1, 1], [], []>} : vector<8x42xbf16>, vector<42x64xbf16>, vector<8x64xf32> -> vector<8x64xf32>
    %c0_3 = arith.constant 0 : index
    %c0_4 = arith.constant 0 : index
    %3 = vector.load %arg3[%c0_3, %c0_4] : memref<1x64xf32, #tpu.memory_space<vmem>>, vector<1x64xf32>
    %4 = vector.broadcast %3 : vector<1x64xf32> to vector<8x64xf32>
    %5 = arith.addf %2, %4 : vector<8x64xf32>
    %cst_5 = arith.constant 0.000000e+00 : f32
    %6 = vector.broadcast %cst_5 : f32 to vector<8x64xf32>
    %7 = arith.maximumf %5, %6 : vector<8x64xf32>
    %8 = arith.truncf %7 : vector<8x64xf32> to vector<8x64xbf16>
    %c0_6 = arith.constant 0 : index
    %c0_7 = arith.constant 0 : index
    %9 = vector.load %arg4[%c0_6, %c0_7] : memref<64x5xbf16, #tpu.memory_space<vmem>>, vector<64x5xbf16>
    %cst_8 = arith.constant dense<0.000000e+00> : vector<8x5xf32>
    %10 = tpu.matmul %8, %9, %cst_8 {dimension_numbers = #tpu.dot_dimension_numbers<[1], [0], [0], [1], [0, 0, 1, 1], [], []>} : vector<8x64xbf16>, vector<64x5xbf16>, vector<8x5xf32> -> vector<8x5xf32>
    %c0_9 = arith.constant 0 : index
    %c0_10 = arith.constant 0 : index
    %11 = vector.load %arg5[%c0_9, %c0_10] : memref<1x5xf32, #tpu.memory_space<vmem>>, vector<1x5xf32>
    %12 = vector.broadcast %11 : vector<1x5xf32> to vector<8x5xf32>
    %13 = arith.addf %10, %12 : vector<8x5xf32>
    %cst_11 = arith.constant dense<0xFF800000> : vector<8xf32>
    %14 = vector.multi_reduction <maximumf>, %13, %cst_11 [1] : vector<8x5xf32> to vector<8xf32>
    %15 = vector.shape_cast %14 : vector<8xf32> to vector<8x1xf32>
    %16 = vector.broadcast %15 : vector<8x1xf32> to vector<8x5xf32>
    %17 = arith.subf %13, %16 : vector<8x5xf32>
    %18 = math.exp %17 : vector<8x5xf32>
    %cst_12 = arith.constant dense<0.000000e+00> : vector<8xf32>
    %19 = vector.multi_reduction <add>, %18, %cst_12 [1] : vector<8x5xf32> to vector<8xf32>
    %20 = vector.shape_cast %19 : vector<8xf32> to vector<8x1xf32>
    %21 = vector.broadcast %20 : vector<8x1xf32> to vector<8x5xf32>
    %22 = arith.divf %18, %21 : vector<8x5xf32>
    %c0_13 = arith.constant 0 : index
    %c0_14 = arith.constant 0 : index
    %23 = vector.load %arg6[%c0_13, %c0_14] : memref<8x5xf32, #tpu.memory_space<vmem>>, vector<8x5xf32>
    tpu.vector_store %arg6[%c0_13, %c0_14], %22 {strides = array<i32>} : memref<8x5xf32, #tpu.memory_space<vmem>>, vector<8x5xf32>,
    return
  }
  func.func @transform_0(%arg0: i32) -> (i32, i32) {
    %c0_i32 = arith.constant 0 : i32
    %c0_i32_0 = arith.constant 0 : i32
    return %arg0, %c0_i32 : i32, i32
  }
  func.func @transform_1(%arg0: i32) -> (i32, i32) {
    %c0_i32 = arith.constant 0 : i32
    %c0_i32_0 = arith.constant 0 : i32
    %c0_i32_1 = arith.constant 0 : i32
    return %c0_i32, %c0_i32_0 : i32, i32
  }
  func.func @transform_2(%arg0: i32) -> (i32, i32) {
    %c0_i32 = arith.constant 0 : i32
    %c0_i32_0 = arith.constant 0 : i32
    %c0_i32_1 = arith.constant 0 : i32
    return %c0_i32, %c0_i32_0 : i32, i32
  }
  func.func @transform_3(%arg0: i32) -> (i32, i32) {
    %c0_i32 = arith.constant 0 : i32
    %c0_i32_0 = arith.constant 0 : i32
    %c0_i32_1 = arith.constant 0 : i32
    return %c0_i32, %c0_i32_0 : i32, i32
  }
  func.func @transform_4(%arg0: i32) -> (i32, i32) {
    %c0_i32 = arith.constant 0 : i32
    %c0_i32_0 = arith.constant 0 : i32
    %c0_i32_1 = arith.constant 0 : i32
    return %c0_i32, %c0_i32_0 : i32, i32
  }
  func.func @transform_5(%arg0: i32) -> (i32, i32) {
    %c0_i32 = arith.constant 0 : i32
    %c0_i32_0 = arith.constant 0 : i32
    return %arg0, %c0_i32 : i32, i32
  }
}

</mosaic_0001>

<llo_original>
// kernel: tpu_custom_call.1
$region0: #{tpu_custom_call.1}
  #allocation0 [shape = 'u32[]', space=smem, size = 0x4, offset = 0x4, fixed_abs, tag = 'smem constant byte address 0x4 - core index']
  #allocation1 [shape = 'u32[72,128]{1,0:T(1,128)}', space=vmem, size = 0x9000, scoped, tag = 'internal scratch']
  %s0 = inlined_call_operand.vmem [shape: bf16[8,42], index: 0, kind: input, shape index: {}]
  %s1 = inlined_call_operand.vmem [shape: bf16[42,64], index: 1, kind: input, shape index: {}]
  %s2 = inlined_call_operand.vmem [shape: f32[1,64], index: 2, kind: input, shape index: {}]
  %s3 = inlined_call_operand.vmem [shape: bf16[64,5], index: 3, kind: input, shape index: {}]
  %s4 = inlined_call_operand.vmem [shape: f32[1,5], index: 4, kind: input, shape index: {}]
  %s5 = inlined_call_operand.hbm [shape: f32[8,5], index: 5, kind: output, shape index: {}]
  %s6 = sld [smem:[#allocation0]]
  $region30: #{tpu_custom_call.1} parent=0
    _
  %s8 = ssub.s32 1, %s6
  %s9 = scalar_select 0, %s8, %s6
  $region1: #{tpu_custom_call.1} parent=0
    #allocation2 [shape = 'u8[4096]{0}', space=vmem, size = 0x1000, scoped, tag = 'output window, operand 0, single buffered']
    #allocation3 [shape = 's32[1]{0}', space=sflag, size = 0x4, scoped, tag = 'scoped memory for tpu_custom_call.1']
    %10 = vsyncpa [#allocation3], 0
    // Predicated region
    $region2: #{tpu_custom_call.1} parent=1 // pred_check
      _
    $region3: #{tpu_custom_call.1} parent=1 // pred_check_branch
      %12 = sbr.rel (0) target = $region5
    $region4: #{tpu_custom_call.1} parent=1 // pred_region
      _
    $region5: #{tpu_custom_call.1} parent=1 // pred_fallthru
      _
    // Predicated region
    $region6: #{tpu_custom_call.1} parent=1 // pred_check
      _
    $region7: #{tpu_custom_call.1} parent=1 // pred_check_branch
      %14 = sbr.rel (0) target = $region9
    $region8: #{tpu_custom_call.1} parent=1 // pred_region
      _
    $region9: #{tpu_custom_call.1} parent=1 // pred_fallthru
      _
    // Predicated region
    $region10: #{tpu_custom_call.1} parent=1 // pred_check
      _
    $region11: #{tpu_custom_call.1} parent=1 // pred_check_branch
      %16 = sbr.rel (0) target = $region13
    $region12: #{tpu_custom_call.1} parent=1 // pred_region
      _
    $region13: #{tpu_custom_call.1} parent=1 // pred_fallthru
      _
    // Predicated region
    $region14: #{tpu_custom_call.1} parent=1 // pred_check
      _
    $region15: #{tpu_custom_call.1} parent=1 // pred_check_branch
      %18 = sbr.rel (0) target = $region17
    $region16: #{tpu_custom_call.1} parent=1 // pred_region
      _
    $region17: #{tpu_custom_call.1} parent=1 // pred_fallthru
      _
    // Predicated region
    $region18: #{tpu_custom_call.1} parent=1 // pred_check
      _
    $region19: #{tpu_custom_call.1} parent=1 // pred_check_branch
      %20 = sbr.rel (0) target = $region21
    $region20: #{tpu_custom_call.1} parent=1 // pred_region
      _
    $region21: #{tpu_custom_call.1} parent=1 // pred_fallthru
      _
    %v22 = vld [vmem:[%s0] sm:$0xf]
    %v23 = vld [vmem:[%s1] sm:$0xf]
    %v24 = vld [vmem:[%s1 + $0x4] sm:$0xf]
    %v25 = vld [vmem:[%s1 + $0x8] sm:$0xf]
    %v26 = vld [vmem:[%s1 + $0xc] sm:$0xf]
    %v27 = vld [vmem:[%s1 + $0x10] sm:$0xf]
    %v28 = vld [vmem:[%s1 + $0x14] sm:$0x1]
    %v29 = vld [vmem:[%s2] sm:$0x1]
    %v31 = vperm.slane %v29, 0
    %v39 = vunpack.c.l.b16 %v23
    %v40 = vunpack.c.l.b16 %v24
    %v41 = vunpack.c.l.b16 %v25
    %v42 = vunpack.c.l.b16 %v26
    %v43 = vunpack.c.l.b16 %v27
    %v44 = vunpack.c.l.b16 %v28
    %v45 = vpack.c.b16 %v40, %v39
    %v46 = vpack.c.b16 %v42, %v41
    %v47 = vpack.c.b16 %v44, %v43
    %vm50 = vcmask 343040
    %v52 = vsel %vm50, %v22, 0
    %vm54 = vcmask 1044480
    %v56 = vsel %vm54, %v47, 0
    %58 = vmatpush.bf16.msra.mxu0 0
    %59 = vmatpush.bf16.msra.mxu0 0
    %60 = vmatpush.bf16.msra.mxu0 0
    %61 = vmatpush.bf16.msra.mxu0 0
    %62 = vmatpush.bf16.msra.mxu0 0
    %63 = vmatpush.bf16.msra.mxu0 %v56
    %64 = vmatpush.bf16.msra.mxu0 %v46
    %65 = vmatpush.bf16.msra.mxu0 %v45
    %66 = vmatmul.bf16.gmra.mxu0 %v52
    %v67 = vpop.f32.mrf.mxu0
    %v68 = vadd.f32 %v31, %v67
    %v69 = vpop.f32.mrf.mxu0
    %70 = vdwg.mxu0
    %v71 = vmax.f32 %v68, 0.0
    %v72 = vpack.c.bf16 %v71, %v71
    %v73 = vld [vmem:[%s3] sm:$0xf]
    %v74 = vld [vmem:[%s3 + $0x4] sm:$0xf]
    %v75 = vld [vmem:[%s3 + $0x8] sm:$0xf]
    %v76 = vld [vmem:[%s3 + $0xc] sm:$0xf]
    %v77 = vld [vmem:[%s3 + $0x10] sm:$0xf]
    %v78 = vld [vmem:[%s3 + $0x14] sm:$0xf]
    %v79 = vld [vmem:[%s3 + $0x18] sm:$0xf]
    %v80 = vld [vmem:[%s3 + $0x1c] sm:$0xf]
    %v81 = vld [vmem:[%s4] sm:$0x1]
    %v83 = vperm.slane %v81, 0
    %v93 = vunpack.c.l.b16 %v73
    %v94 = vunpack.c.l.b16 %v74
    %v95 = vunpack.c.l.b16 %v75
    %v96 = vunpack.c.l.b16 %v76
    %v97 = vunpack.c.l.b16 %v77
    %v98 = vunpack.c.l.b16 %v78
    %v99 = vunpack.c.l.b16 %v79
    %v100 = vunpack.c.l.b16 %v80
    %v101 = vpack.c.b16 %v94, %v93
    %v102 = vpack.c.b16 %v96, %v95
    %v103 = vpack.c.b16 %v98, %v97
    %v104 = vpack.c.b16 %v100, %v99
    %vm109 = vcmask 523264
    %v111 = vsel %vm109, %v72, 0
    %113 = vmatpush.bf16.msra.mxu0 0
    %114 = vmatpush.bf16.msra.mxu0 0
    %115 = vmatpush.bf16.msra.mxu0 0
    %116 = vmatpush.bf16.msra.mxu0 0
    %117 = vmatpush.bf16.msra.mxu0 %v104
    %118 = vmatpush.bf16.msra.mxu0 %v103
    %119 = vmatpush.bf16.msra.mxu0 %v102
    %120 = vmatpush.bf16.msra.mxu0 %v101
    %121 = vmatmul.bf16.gmra.mxu0 %v111
    %v122 = vpop.f32.mrf.mxu0
    %v123 = vadd.f32 %v83, %v122
    %v124 = vpop.f32.mrf.mxu0
    %125 = vdwg.mxu0
    %vm126 = vcmask 39936
    %v127 = vsel %vm126, %v123, -inf
    %128 = vmax.xlane.f32.xlu0 %v127
    %v129 = vpop.xlane.xlu0 %128
    %v130 = vsub.f32 %v123, %v129
    %v131 = vmul.f32 %v130, 1.442695
    %v132 = vpow.pop %v131
    %v133 = vsel %vm126, %v132, 0.0
    %134 = vadd.xlane.f32.xlu0 %v133
    %v135 = vpop.xlane.xlu0 %134
    %v136 = vrcp.pop %v135
    %v137 = vmul.f32 %v135, %v136
    %v138 = vsub.f32 1.0, %v137
    %v139 = vmul.f32 %v136, %v138
    %v140 = vadd.f32 %v136, %v139
    %vm141 = vweird.f32 %v135
    %vm142 = vweird.f32 %v136
    %vm143 = vmor %vm141, %vm142
    %v144 = vsel %vm143, %v136, %v140
    %v145 = vand.u32 2147483647, %v135
    %vm146 = vcmp.eq.f32.partialorder %v145, 8.507059e+37
    %v147 = vand.u32 %v135, 2147483648
    %v148 = vor.u32 1.1754944e-38, %v147
    %v149 = vsel %vm146, %v148, %v144
    %v150 = vmul.f32 %v132, %v149
    %151 = vst.msk [vmem:[#allocation2] sm:$0xff] %vm126, %v150
    // Predicated region
    $region22: #{tpu_custom_call.1} parent=1 // pred_check
      _
    $region23: #{tpu_custom_call.1} parent=1 // pred_check_branch
      %153 = sbr.rel (0) target = $region25
    $region24: #{tpu_custom_call.1} parent=1 // pred_region
      %155 = vsyncadd [#allocation3], 0
      %s157 = sshll.u32 [#allocation2], 4
      %s158 = int_to_ptr.vmem [resolvable:$true] %s157
      %s159 = sshll.u32 %s5, 4
      %s160 = int_to_ptr.hbm [resolvable:$true] %s159
      %162 = dma.vmem_to_hbm [thread:$0]  %s158, 128, %s160, [#allocation3]
    $region25: #{tpu_custom_call.1} parent=1 // pred_fallthru
      _
    // Predicated region
    $region26: #{tpu_custom_call.1} parent=1 // pred_check
      _
    $region27: #{tpu_custom_call.1} parent=1 // pred_check_branch
      %164 = sbr.rel (0) target = $region29
    $region28: #{tpu_custom_call.1} parent=1 // pred_region
      %166 = dma.done [#allocation3], 128
    $region29: #{tpu_custom_call.1} parent=1 // pred_fallthru
      _
    %167 = vsyncpa [#allocation3], 1

</llo_original>
